<compile_context>
chip_gen: v5e
topology: v5e:2x2
jax: 0.10.0
libtpu: 0.0.40
codegen_flags: <defaults>
</compile_context>

<pallas_src>
import math

import jax
import jax.numpy as jnp
from jax.experimental import pallas as pl
from jax.experimental.pallas import tpu as pltpu


# ----------------------------- model config ---------------------------------
B = 2          # batch
T = 8          # sequence length == n_ctx  (power of two -> bit-mask batch test)
C = 32         # n_embd
H = 4          # n_head
D = C // H     # head dim
EPS = 1e-5     # layer_norm_epsilon
MASKED_BIAS = -10000.0

assert (T & (T - 1)) == 0, "T must be a power of two for the bit-mask batch test"
_BATCH_MASK = ~(T - 1)       # i & _BATCH_MASK == T * (i // T)

# packed small-vector tile layout (rows; width C unless noted)
#   0: ln1_gamma   1: ln1_beta   2: ln2_gamma   3: ln2_beta
#   4: b_fc (width 4C)           5: b_mlp_proj
#   6: b_att_out  (= b_c_proj + b_v @ W_c_proj, v-bias folded through c_proj)
#   7 .. 7+H-1      : b_q  head h  (width D)
#   7+H .. 7+2H-1   : b_k  head h  (width D)
_VEC_ROWS = max(16, ((7 + 2 * H + 7) // 8) * 8)


def _layer_norm(x, gamma, beta):
    mu = jnp.mean(x, axis=-1, keepdims=True)
    var = jnp.mean((x - mu) ** 2, axis=-1, keepdims=True)
    inv = jax.lax.rsqrt(var + EPS)
    return (x - mu) * inv * gamma + beta


def _gelu_new(x):
    # GPT-2 "gelu_new": 0.5*x*(1+tanh(sqrt(2/pi)*(x+0.044715*x^3)))
    c = math.sqrt(2.0 / math.pi)
    return 0.5 * x * (1.0 + jnp.tanh(c * (x + 0.044715 * x * x * x)))


def _softmax_rows(s):
    m = jnp.max(s, axis=-1, keepdims=True)
    e = jnp.exp(s - m)
    return e / jnp.sum(e, axis=-1, keepdims=True)   # exact reciprocal (no flake)


# ------------------------------- kernel --------------------------------------
def block_kernel(x_ref, vec_ref, w_qk_ref, w_vap_ref, w_fc_ref, w_mproj_ref,
                 o_ref):
    """One gridless invocation over all B*T rows laid out as (N, C)."""
    x = x_ref[...]                       # (N, C)
    vecs = vec_ref[...]                  # (_VEC_ROWS, 4C)
    w_qk = w_qk_ref[...]                 # (2*H*C, D)  head-major [Wq heads; Wk heads]
    w_vap = w_vap_ref[...]               # (C, H*C)    per-head W_v @ W_c_proj fold

    ln1_g = vecs[0:1, 0:C]
    ln1_b = vecs[1:2, 0:C]
    ln2_g = vecs[2:3, 0:C]
    ln2_b = vecs[3:4, 0:C]
    b_fc  = vecs[4:5, :]                 # width 4C
    b_mp  = vecs[5:6, 0:C]
    b_att = vecs[6:7, 0:C]

    n = x.shape[0]

    # ---- LayerNorm 1 ----
    xn = _layer_norm(x, ln1_g, ln1_b)

    # ---- value path: c_attn(v) and c_proj pre-folded into one lane-dense matmul ----
    vp = jnp.dot(xn, w_vap, preferred_element_type=jnp.float32)   # (N, H*C)

    # block-diagonal causal mask over the collapsed (N, N) score matrix:
    # rows attend only to columns in the same batch element AND <= their position.
    rows = jax.lax.broadcasted_iota(jnp.int32, (n, n), 0)
    cols = jax.lax.broadcasted_iota(jnp.int32, (n, n), 1)
    same_batch = (rows & _BATCH_MASK) == (cols & _BATCH_MASK)
    allowed = same_batch & (rows >= cols)

    acc = jnp.zeros((n, C), jnp.float32)
    for h in range(H):
        # head selection = sublane (row) slices of the head-major weight pack
        wq_h = w_qk[h * C:(h + 1) * C, :]             # (C, D)
        wk_h = w_qk[(H + h) * C:(H + h + 1) * C, :]   # (C, D)
        bq_h = vecs[7 + h:8 + h, 0:D]                 # (1, D)
        bk_h = vecs[7 + H + h:8 + H + h, 0:D]         # (1, D)

        qh = jnp.dot(xn, wq_h, preferred_element_type=jnp.float32) + bq_h
        kh = jnp.dot(xn, wk_h, preferred_element_type=jnp.float32) + bk_h

        # q @ k^T without materializing a transpose (contract last dims)
        s = jax.lax.dot_general(qh, kh, (((1,), (1,)), ((), ())),
                                preferred_element_type=jnp.float32)   # (N, N)
        # scale=False in Block(..., scale=False): no 1/sqrt(D)
        s = jnp.where(allowed, s, jnp.float32(MASKED_BIAS))
        # cross-batch / causal-masked entries: exp(-1e4 - rowmax) underflows to
        # exactly 0 in f32, so the block-diagonal fold is exact (f32 score math).
        p = _softmax_rows(s)                                          # (N, N)

        # c_proj already folded into vp: just accumulate p_h @ vp_h
        acc = acc + jnp.dot(p, vp[:, h * C:(h + 1) * C],
                            preferred_element_type=jnp.float32)

    a = acc + b_att
    x1 = x + a                                   # residual 1

    # ---- LayerNorm 2 + MLP ----
    x1n = _layer_norm(x1, ln2_g, ln2_b)
    hid = jnp.dot(x1n, w_fc_ref[...], preferred_element_type=jnp.float32) + b_fc
    hid = _gelu_new(hid)
    m = jnp.dot(hid, w_mproj_ref[...], preferred_element_type=jnp.float32) + b_mp

    o_ref[...] = x1 + m                          # residual 2


# --------------------------- parameter packing --------------------------------
def pack_params(params):
    """One-time host-side repacking of Block parameters (hoisted out of the call)."""
    (ln1_g, ln1_b, w_attn, b_attn, w_aproj, b_aproj,
     ln2_g, ln2_b, w_fc, b_fc, w_mproj, b_mproj) = params

    w_q, w_k, w_v = w_attn[:, 0:C], w_attn[:, C:2 * C], w_attn[:, 2 * C:3 * C]
    b_q, b_k, b_v = b_attn[:, 0:C], b_attn[:, C:2 * C], b_attn[:, 2 * C:3 * C]

    # head-major q/k weights: rows [h*C:(h+1)*C] = W_{q|k}[:, h*D:(h+1)*D]
    w_qk = jnp.concatenate(
        [w_q[:, h * D:(h + 1) * D] for h in range(H)]
        + [w_k[:, h * D:(h + 1) * D] for h in range(H)], axis=0)      # (2*H*C, D)

    # per-head fold of W_v with the matching rows of W_c_proj -> lane-dense weight
    w_vap = jnp.concatenate(
        [w_v[:, h * D:(h + 1) * D] @ w_aproj[h * D:(h + 1) * D, :]
         for h in range(H)], axis=1)                                   # (C, H*C)

    # fold b_v through c_proj (softmax rows sum to 1) and merge with b_c_proj
    b_att = b_aproj + b_v @ w_aproj                                    # (1, C)

    vecs = jnp.zeros((_VEC_ROWS, 4 * C), jnp.float32)
    vecs = vecs.at[0, 0:C].set(ln1_g[0])
    vecs = vecs.at[1, 0:C].set(ln1_b[0])
    vecs = vecs.at[2, 0:C].set(ln2_g[0])
    vecs = vecs.at[3, 0:C].set(ln2_b[0])
    vecs = vecs.at[4, 0:4 * C].set(b_fc[0])
    vecs = vecs.at[5, 0:C].set(b_mproj[0])
    vecs = vecs.at[6, 0:C].set(b_att[0])
    for h in range(H):
        vecs = vecs.at[7 + h, 0:D].set(b_q[0, h * D:(h + 1) * D])
        vecs = vecs.at[7 + H + h, 0:D].set(b_k[0, h * D:(h + 1) * D])

    return (vecs, w_qk, w_vap, w_fc, w_mproj)


# ------------------------------- wrapper --------------------------------------
@jax.jit
def gpt2_block(x, packed):
    """x: (B, T, C); packed: output of pack_params()."""
    vecs, w_qk, w_vap, w_fc, w_mproj = packed
    b, t, c = x.shape
    x2d = x.reshape(b * t, c)            # collapsed, gridless: whole block in VMEM
    out2d = pl.pallas_call(
        block_kernel,
        out_shape=jax.ShapeDtypeStruct((b * t, c), jnp.float32),
    )(x2d, vecs, w_qk, w_vap, w_fc, w_mproj)
    return out2d.reshape(b, t, c)


# ----------------------------- pure-JAX reference -----------------------------
def gpt2_block_ref(x, params):
    (ln1_g, ln1_b, w_attn, b_attn, w_aproj, b_aproj,
     ln2_g, ln2_b, w_fc, b_fc, w_mproj, b_mproj) = params

    def ln(z, g, bta):
        mu = jnp.mean(z, axis=-1, keepdims=True)
        var = jnp.mean((z - mu) ** 2, axis=-1, keepdims=True)
        return (z - mu) / jnp.sqrt(var + EPS) * g + bta

    xn = ln(x, ln1_g, ln1_b)
    qkv = xn @ w_attn + b_attn
    q, k, v = jnp.split(qkv, 3, axis=-1)
    split = lambda z: z.reshape(B, T, H, D).transpose(0, 2, 1, 3)
    q, k, v = split(q), split(k), split(v)
    s = jnp.einsum("bhtd,bhsd->bhts", q, k)
    causal = jnp.tril(jnp.ones((T, T), dtype=bool))
    s = jnp.where(causal, s, MASKED_BIAS)
    p = jax.nn.softmax(s, axis=-1)
    a = jnp.einsum("bhts,bhsd->bhtd", p, v).transpose(0, 2, 1, 3).reshape(B, T, C)
    a = a @ w_aproj + b_aproj
    x1 = x + a
    x1n = ln(x1, ln2_g, ln2_b)
    hid = x1n @ w_fc + b_fc
    cst = math.sqrt(2.0 / math.pi)
    hid = 0.5 * hid * (1.0 + jnp.tanh(cst * (hid + 0.044715 * hid ** 3)))
    m = hid @ w_mproj + b_mproj
    return x1 + m


# --------------------------------- main ----------------------------------------
if __name__ == "__main__":
    key = jax.random.PRNGKey(0)
    keys = jax.random.split(key, 8)

    x = jax.random.normal(keys[0], (B, T, C), dtype=jnp.float32)

    # deterministic GPT-2-like init: weights ~N(0, 0.02), biases 0, LN gamma=1
    # beta=0; 1-D params stored as (1, N).
    ln1_g = jnp.ones((1, C), jnp.float32)
    ln1_b = jnp.zeros((1, C), jnp.float32)
    ln2_g = jnp.ones((1, C), jnp.float32)
    ln2_b = jnp.zeros((1, C), jnp.float32)
    w_attn  = 0.02 * jax.random.normal(keys[1], (C, 3 * C), dtype=jnp.float32)
    b_attn  = jnp.zeros((1, 3 * C), jnp.float32)
    w_aproj = 0.02 * jax.random.normal(keys[2], (C, C), dtype=jnp.float32)
    b_aproj = jnp.zeros((1, C), jnp.float32)
    w_fc    = 0.02 * jax.random.normal(keys[3], (C, 4 * C), dtype=jnp.float32)
    b_fc    = jnp.zeros((1, 4 * C), jnp.float32)
    w_mproj = 0.02 * jax.random.normal(keys[4], (4 * C, C), dtype=jnp.float32)
    b_mproj = jnp.zeros((1, C), jnp.float32)

    params = (ln1_g, ln1_b, w_attn, b_attn, w_aproj, b_aproj,
              ln2_g, ln2_b, w_fc, b_fc, w_mproj, b_mproj)

    packed = jax.block_until_ready(pack_params(params))   # one-time packing

    out = gpt2_block(x, packed)
    out = jax.block_until_ready(out)

    ref = gpt2_block_ref(x, params)
    assert out.shape == (B, T, C)
    assert jnp.allclose(out, ref, atol=1e-4, rtol=1e-4), "mismatch vs JAX reference"

    print("KERNEL_OK")
</pallas_src>

<mosaic_0001>
module attributes {stable_mosaic.version = 11 : i64} {
  func.func @block_kernel(%arg0: memref<16x32xf32, #tpu.memory_space<vmem>>, %arg1: memref<16x128xf32, #tpu.memory_space<vmem>>, %arg2: memref<256x8xf32, #tpu.memory_space<vmem>>, %arg3: memref<32x128xf32, #tpu.memory_space<vmem>>, %arg4: memref<32x128xf32, #tpu.memory_space<vmem>>, %arg5: memref<128x32xf32, #tpu.memory_space<vmem>>, %arg6: memref<16x32xf32, #tpu.memory_space<vmem>>) attributes {dimension_semantics = [], scalar_prefetch = 0 : i64, scratch_operands = 0 : i64, tpu.core_type = #tpu.core_type<tc>} {
    %c0 = arith.constant 0 : index
    %c0_0 = arith.constant 0 : index
    %0 = vector.load %arg0[%c0, %c0_0] : memref<16x32xf32, #tpu.memory_space<vmem>>, vector<16x32xf32>
    %c0_1 = arith.constant 0 : index
    %c0_2 = arith.constant 0 : index
    %1 = vector.load %arg1[%c0_1, %c0_2] : memref<16x128xf32, #tpu.memory_space<vmem>>, vector<16x128xf32>
    %c0_3 = arith.constant 0 : index
    %c0_4 = arith.constant 0 : index
    %2 = vector.load %arg2[%c0_3, %c0_4] : memref<256x8xf32, #tpu.memory_space<vmem>>, vector<256x8xf32>
    %c0_5 = arith.constant 0 : index
    %c0_6 = arith.constant 0 : index
    %3 = vector.load %arg3[%c0_5, %c0_6] : memref<32x128xf32, #tpu.memory_space<vmem>>, vector<32x128xf32>
    %4 = vector.extract_strided_slice %1 {offsets = [0, 0], sizes = [1, 32], strides = [1, 1]} : vector<16x128xf32> to vector<1x32xf32>
    %5 = vector.extract_strided_slice %1 {offsets = [1, 0], sizes = [1, 32], strides = [1, 1]} : vector<16x128xf32> to vector<1x32xf32>
    %6 = vector.extract_strided_slice %1 {offsets = [2, 0], sizes = [1, 32], strides = [1, 1]} : vector<16x128xf32> to vector<1x32xf32>
    %7 = vector.extract_strided_slice %1 {offsets = [3, 0], sizes = [1, 32], strides = [1, 1]} : vector<16x128xf32> to vector<1x32xf32>
    %8 = vector.extract_strided_slice %1 {offsets = [4, 0], sizes = [1, 128], strides = [1, 1]} : vector<16x128xf32> to vector<1x128xf32>
    %9 = vector.extract_strided_slice %1 {offsets = [5, 0], sizes = [1, 32], strides = [1, 1]} : vector<16x128xf32> to vector<1x32xf32>
    %10 = vector.extract_strided_slice %1 {offsets = [6, 0], sizes = [1, 32], strides = [1, 1]} : vector<16x128xf32> to vector<1x32xf32>
    %cst = arith.constant dense<0.000000e+00> : vector<16xf32>
    %11 = vector.multi_reduction <add>, %0, %cst [1] : vector<16x32xf32> to vector<16xf32>
    %12 = vector.shape_cast %11 : vector<16xf32> to vector<16x1xf32>
    %cst_7 = arith.constant 3.200000e+01 : f32
    %13 = vector.broadcast %cst_7 : f32 to vector<16x1xf32>
    %14 = arith.divf %12, %13 : vector<16x1xf32>
    %15 = vector.broadcast %14 : vector<16x1xf32> to vector<16x32xf32>
    %16 = arith.subf %0, %15 : vector<16x32xf32>
    %17 = arith.mulf %16, %16 : vector<16x32xf32>
    %cst_8 = arith.constant dense<0.000000e+00> : vector<16xf32>
    %18 = vector.multi_reduction <add>, %17, %cst_8 [1] : vector<16x32xf32> to vector<16xf32>
    %19 = vector.shape_cast %18 : vector<16xf32> to vector<16x1xf32>
    %cst_9 = arith.constant 3.200000e+01 : f32
    %20 = vector.broadcast %cst_9 : f32 to vector<16x1xf32>
    %21 = arith.divf %19, %20 : vector<16x1xf32>
    %cst_10 = arith.constant 9.99999974E-6 : f32
    %22 = vector.broadcast %cst_10 : f32 to vector<16x1xf32>
    %23 = arith.addf %21, %22 : vector<16x1xf32>
    %24 = math.rsqrt %23 : vector<16x1xf32>
    %25 = vector.broadcast %14 : vector<16x1xf32> to vector<16x32xf32>
    %26 = arith.subf %0, %25 : vector<16x32xf32>
    %27 = vector.broadcast %24 : vector<16x1xf32> to vector<16x32xf32>
    %28 = arith.mulf %26, %27 : vector<16x32xf32>
    %29 = vector.broadcast %4 : vector<1x32xf32> to vector<16x32xf32>
    %30 = arith.mulf %28, %29 : vector<16x32xf32>
    %31 = vector.broadcast %5 : vector<1x32xf32> to vector<16x32xf32>
    %32 = arith.addf %30, %31 : vector<16x32xf32>
    %cst_11 = arith.constant dense<0.000000e+00> : vector<16x128xf32>
    %33 = tpu.matmul %32, %3, %cst_11 {dimension_numbers = #tpu.dot_dimension_numbers<[1], [0], [0], [1], [0, 0, 1, 1], [], []>} : vector<16x32xf32>, vector<32x128xf32>, vector<16x128xf32> -> vector<16x128xf32>
    %34 = tpu.iota {dimensions = array<i32: 0>} : vector<16x16xi32>
    %35 = tpu.iota {dimensions = array<i32: 1>} : vector<16x16xi32>
    %c-8_i32 = arith.constant -8 : i32
    %36 = vector.broadcast %c-8_i32 : i32 to vector<16x16xi32>
    %37 = arith.andi %34, %36 : vector<16x16xi32>
    %c-8_i32_12 = arith.constant -8 : i32
    %38 = vector.broadcast %c-8_i32_12 : i32 to vector<16x16xi32>
    %39 = arith.andi %35, %38 : vector<16x16xi32>
    %40 = arith.cmpi eq, %37, %39 : vector<16x16xi32>
    %41 = arith.cmpi sge, %34, %35 : vector<16x16xi32>
    %42 = arith.andi %40, %41 : vector<16x16xi1>
    %cst_13 = arith.constant 0.000000e+00 : f32
    %43 = vector.broadcast %cst_13 : f32 to vector<16x32xf32>
    %44 = vector.extract_strided_slice %2 {offsets = [0, 0], sizes = [32, 8], strides = [1, 1]} : vector<256x8xf32> to vector<32x8xf32>
    %45 = vector.extract_strided_slice %2 {offsets = [128, 0], sizes = [32, 8], strides = [1, 1]} : vector<256x8xf32> to vector<32x8xf32>
    %46 = vector.extract_strided_slice %1 {offsets = [7, 0], sizes = [1, 8], strides = [1, 1]} : vector<16x128xf32> to vector<1x8xf32>
    %47 = vector.extract_strided_slice %1 {offsets = [11, 0], sizes = [1, 8], strides = [1, 1]} : vector<16x128xf32> to vector<1x8xf32>
    %cst_14 = arith.constant dense<0.000000e+00> : vector<16x8xf32>
    %48 = tpu.matmul %32, %44, %cst_14 {dimension_numbers = #tpu.dot_dimension_numbers<[1], [0], [0], [1], [0, 0, 1, 1], [], []>} : vector<16x32xf32>, vector<32x8xf32>, vector<16x8xf32> -> vector<16x8xf32>
    %49 = vector.broadcast %46 : vector<1x8xf32> to vector<16x8xf32>
    %50 = arith.addf %48, %49 : vector<16x8xf32>
    %cst_15 = arith.constant dense<0.000000e+00> : vector<16x8xf32>
    %51 = tpu.matmul %32, %45, %cst_15 {dimension_numbers = #tpu.dot_dimension_numbers<[1], [0], [0], [1], [0, 0, 1, 1], [], []>} : vector<16x32xf32>, vector<32x8xf32>, vector<16x8xf32> -> vector<16x8xf32>
    %52 = vector.broadcast %47 : vector<1x8xf32> to vector<16x8xf32>
    %53 = arith.addf %51, %52 : vector<16x8xf32>
    %cst_16 = arith.constant dense<0.000000e+00> : vector<16x16xf32>
    %54 = tpu.matmul %50, %53, %cst_16 {dimension_numbers = #tpu.dot_dimension_numbers<[1], [1], [0], [0], [0, 0, 1, 0], [], []>} : vector<16x8xf32>, vector<16x8xf32>, vector<16x16xf32> -> vector<16x16xf32>
    %cst_17 = arith.constant -1.000000e+04 : f32
    %55 = vector.broadcast %cst_17 : f32 to vector<16x16xf32>
    %56 = arith.select %42, %54, %55 : vector<16x16xi1>, vector<16x16xf32>
    %cst_18 = arith.constant dense<0xFF800000> : vector<16xf32>
    %57 = vector.multi_reduction <maximumf>, %56, %cst_18 [1] : vector<16x16xf32> to vector<16xf32>
    %58 = vector.shape_cast %57 : vector<16xf32> to vector<16x1xf32>
    %59 = vector.broadcast %58 : vector<16x1xf32> to vector<16x16xf32>
    %60 = arith.subf %56, %59 : vector<16x16xf32>
    %61 = math.exp %60 : vector<16x16xf32>
    %cst_19 = arith.constant dense<0.000000e+00> : vector<16xf32>
    %62 = vector.multi_reduction <add>, %61, %cst_19 [1] : vector<16x16xf32> to vector<16xf32>
    %63 = vector.shape_cast %62 : vector<16xf32> to vector<16x1xf32>
    %64 = vector.broadcast %63 : vector<16x1xf32> to vector<16x16xf32>
    %65 = arith.divf %61, %64 : vector<16x16xf32>
    %66 = vector.extract_strided_slice %33 {offsets = [0, 0], sizes = [16, 32], strides = [1, 1]} : vector<16x128xf32> to vector<16x32xf32>
    %cst_20 = arith.constant dense<0.000000e+00> : vector<16x32xf32>
    %67 = tpu.matmul %65, %66, %cst_20 {dimension_numbers = #tpu.dot_dimension_numbers<[1], [0], [0], [1], [0, 0, 1, 1], [], []>} : vector<16x16xf32>, vector<16x32xf32>, vector<16x32xf32> -> vector<16x32xf32>
    %68 = arith.addf %43, %67 : vector<16x32xf32>
    %69 = vector.extract_strided_slice %2 {offsets = [32, 0], sizes = [32, 8], strides = [1, 1]} : vector<256x8xf32> to vector<32x8xf32>
    %70 = vector.extract_strided_slice %2 {offsets = [160, 0], sizes = [32, 8], strides = [1, 1]} : vector<256x8xf32> to vector<32x8xf32>
    %71 = vector.extract_strided_slice %1 {offsets = [8, 0], sizes = [1, 8], strides = [1, 1]} : vector<16x128xf32> to vector<1x8xf32>
    %72 = vector.extract_strided_slice %1 {offsets = [12, 0], sizes = [1, 8], strides = [1, 1]} : vector<16x128xf32> to vector<1x8xf32>
    %cst_21 = arith.constant dense<0.000000e+00> : vector<16x8xf32>
    %73 = tpu.matmul %32, %69, %cst_21 {dimension_numbers = #tpu.dot_dimension_numbers<[1], [0], [0], [1], [0, 0, 1, 1], [], []>} : vector<16x32xf32>, vector<32x8xf32>, vector<16x8xf32> -> vector<16x8xf32>
    %74 = vector.broadcast %71 : vector<1x8xf32> to vector<16x8xf32>
    %75 = arith.addf %73, %74 : vector<16x8xf32>
    %cst_22 = arith.constant dense<0.000000e+00> : vector<16x8xf32>
    %76 = tpu.matmul %32, %70, %cst_22 {dimension_numbers = #tpu.dot_dimension_numbers<[1], [0], [0], [1], [0, 0, 1, 1], [], []>} : vector<16x32xf32>, vector<32x8xf32>, vector<16x8xf32> -> vector<16x8xf32>
    %77 = vector.broadcast %72 : vector<1x8xf32> to vector<16x8xf32>
    %78 = arith.addf %76, %77 : vector<16x8xf32>
    %cst_23 = arith.constant dense<0.000000e+00> : vector<16x16xf32>
    %79 = tpu.matmul %75, %78, %cst_23 {dimension_numbers = #tpu.dot_dimension_numbers<[1], [1], [0], [0], [0, 0, 1, 0], [], []>} : vector<16x8xf32>, vector<16x8xf32>, vector<16x16xf32> -> vector<16x16xf32>
    %cst_24 = arith.constant -1.000000e+04 : f32
    %80 = vector.broadcast %cst_24 : f32 to vector<16x16xf32>
    %81 = arith.select %42, %79, %80 : vector<16x16xi1>, vector<16x16xf32>
    %cst_25 = arith.constant dense<0xFF800000> : vector<16xf32>
    %82 = vector.multi_reduction <maximumf>, %81, %cst_25 [1] : vector<16x16xf32> to vector<16xf32>
    %83 = vector.shape_cast %82 : vector<16xf32> to vector<16x1xf32>
    %84 = vector.broadcast %83 : vector<16x1xf32> to vector<16x16xf32>
    %85 = arith.subf %81, %84 : vector<16x16xf32>
    %86 = math.exp %85 : vector<16x16xf32>
    %cst_26 = arith.constant dense<0.000000e+00> : vector<16xf32>
    %87 = vector.multi_reduction <add>, %86, %cst_26 [1] : vector<16x16xf32> to vector<16xf32>
    %88 = vector.shape_cast %87 : vector<16xf32> to vector<16x1xf32>
    %89 = vector.broadcast %88 : vector<16x1xf32> to vector<16x16xf32>
    %90 = arith.divf %86, %89 : vector<16x16xf32>
    %91 = vector.extract_strided_slice %33 {offsets = [0, 32], sizes = [16, 32], strides = [1, 1]} : vector<16x128xf32> to vector<16x32xf32>
    %cst_27 = arith.constant dense<0.000000e+00> : vector<16x32xf32>
    %92 = tpu.matmul %90, %91, %cst_27 {dimension_numbers = #tpu.dot_dimension_numbers<[1], [0], [0], [1], [0, 0, 1, 1], [], []>} : vector<16x16xf32>, vector<16x32xf32>, vector<16x32xf32> -> vector<16x32xf32>
    %93 = arith.addf %68, %92 : vector<16x32xf32>
    %94 = vector.extract_strided_slice %2 {offsets = [64, 0], sizes = [32, 8], strides = [1, 1]} : vector<256x8xf32> to vector<32x8xf32>
    %95 = vector.extract_strided_slice %2 {offsets = [192, 0], sizes = [32, 8], strides = [1, 1]} : vector<256x8xf32> to vector<32x8xf32>
    %96 = vector.extract_strided_slice %1 {offsets = [9, 0], sizes = [1, 8], strides = [1, 1]} : vector<16x128xf32> to vector<1x8xf32>
    %97 = vector.extract_strided_slice %1 {offsets = [13, 0], sizes = [1, 8], strides = [1, 1]} : vector<16x128xf32> to vector<1x8xf32>
    %cst_28 = arith.constant dense<0.000000e+00> : vector<16x8xf32>
    %98 = tpu.matmul %32, %94, %cst_28 {dimension_numbers = #tpu.dot_dimension_numbers<[1], [0], [0], [1], [0, 0, 1, 1], [], []>} : vector<16x32xf32>, vector<32x8xf32>, vector<16x8xf32> -> vector<16x8xf32>
    %99 = vector.broadcast %96 : vector<1x8xf32> to vector<16x8xf32>
    %100 = arith.addf %98, %99 : vector<16x8xf32>
    %cst_29 = arith.constant dense<0.000000e+00> : vector<16x8xf32>
    %101 = tpu.matmul %32, %95, %cst_29 {dimension_numbers = #tpu.dot_dimension_numbers<[1], [0], [0], [1], [0, 0, 1, 1], [], []>} : vector<16x32xf32>, vector<32x8xf32>, vector<16x8xf32> -> vector<16x8xf32>
    %102 = vector.broadcast %97 : vector<1x8xf32> to vector<16x8xf32>
    %103 = arith.addf %101, %102 : vector<16x8xf32>
    %cst_30 = arith.constant dense<0.000000e+00> : vector<16x16xf32>
    %104 = tpu.matmul %100, %103, %cst_30 {dimension_numbers = #tpu.dot_dimension_numbers<[1], [1], [0], [0], [0, 0, 1, 0], [], []>} : vector<16x8xf32>, vector<16x8xf32>, vector<16x16xf32> -> vector<16x16xf32>
    %cst_31 = arith.constant -1.000000e+04 : f32
    %105 = vector.broadcast %cst_31 : f32 to vector<16x16xf32>
    %106 = arith.select %42, %104, %105 : vector<16x16xi1>, vector<16x16xf32>
    %cst_32 = arith.constant dense<0xFF800000> : vector<16xf32>
    %107 = vector.multi_reduction <maximumf>, %106, %cst_32 [1] : vector<16x16xf32> to vector<16xf32>
    %108 = vector.shape_cast %107 : vector<16xf32> to vector<16x1xf32>
    %109 = vector.broadcast %108 : vector<16x1xf32> to vector<16x16xf32>
    %110 = arith.subf %106, %109 : vector<16x16xf32>
    %111 = math.exp %110 : vector<16x16xf32>
    %cst_33 = arith.constant dense<0.000000e+00> : vector<16xf32>
    %112 = vector.multi_reduction <add>, %111, %cst_33 [1] : vector<16x16xf32> to vector<16xf32>
    %113 = vector.shape_cast %112 : vector<16xf32> to vector<16x1xf32>
    %114 = vector.broadcast %113 : vector<16x1xf32> to vector<16x16xf32>
    %115 = arith.divf %111, %114 : vector<16x16xf32>
    %116 = vector.extract_strided_slice %33 {offsets = [0, 64], sizes = [16, 32], strides = [1, 1]} : vector<16x128xf32> to vector<16x32xf32>
    %cst_34 = arith.constant dense<0.000000e+00> : vector<16x32xf32>
    %117 = tpu.matmul %115, %116, %cst_34 {dimension_numbers = #tpu.dot_dimension_numbers<[1], [0], [0], [1], [0, 0, 1, 1], [], []>} : vector<16x16xf32>, vector<16x32xf32>, vector<16x32xf32> -> vector<16x32xf32>
    %118 = arith.addf %93, %117 : vector<16x32xf32>
    %119 = vector.extract_strided_slice %2 {offsets = [96, 0], sizes = [32, 8], strides = [1, 1]} : vector<256x8xf32> to vector<32x8xf32>
    %120 = vector.extract_strided_slice %2 {offsets = [224, 0], sizes = [32, 8], strides = [1, 1]} : vector<256x8xf32> to vector<32x8xf32>
    %121 = vector.extract_strided_slice %1 {offsets = [10, 0], sizes = [1, 8], strides = [1, 1]} : vector<16x128xf32> to vector<1x8xf32>
    %122 = vector.extract_strided_slice %1 {offsets = [14, 0], sizes = [1, 8], strides = [1, 1]} : vector<16x128xf32> to vector<1x8xf32>
    %cst_35 = arith.constant dense<0.000000e+00> : vector<16x8xf32>
    %123 = tpu.matmul %32, %119, %cst_35 {dimension_numbers = #tpu.dot_dimension_numbers<[1], [0], [0], [1], [0, 0, 1, 1], [], []>} : vector<16x32xf32>, vector<32x8xf32>, vector<16x8xf32> -> vector<16x8xf32>
    %124 = vector.broadcast %121 : vector<1x8xf32> to vector<16x8xf32>
    %125 = arith.addf %123, %124 : vector<16x8xf32>
    %cst_36 = arith.constant dense<0.000000e+00> : vector<16x8xf32>
    %126 = tpu.matmul %32, %120, %cst_36 {dimension_numbers = #tpu.dot_dimension_numbers<[1], [0], [0], [1], [0, 0, 1, 1], [], []>} : vector<16x32xf32>, vector<32x8xf32>, vector<16x8xf32> -> vector<16x8xf32>
    %127 = vector.broadcast %122 : vector<1x8xf32> to vector<16x8xf32>
    %128 = arith.addf %126, %127 : vector<16x8xf32>
    %cst_37 = arith.constant dense<0.000000e+00> : vector<16x16xf32>
    %129 = tpu.matmul %125, %128, %cst_37 {dimension_numbers = #tpu.dot_dimension_numbers<[1], [1], [0], [0], [0, 0, 1, 0], [], []>} : vector<16x8xf32>, vector<16x8xf32>, vector<16x16xf32> -> vector<16x16xf32>
    %cst_38 = arith.constant -1.000000e+04 : f32
    %130 = vector.broadcast %cst_38 : f32 to vector<16x16xf32>
    %131 = arith.select %42, %129, %130 : vector<16x16xi1>, vector<16x16xf32>
    %cst_39 = arith.constant dense<0xFF800000> : vector<16xf32>
    %132 = vector.multi_reduction <maximumf>, %131, %cst_39 [1] : vector<16x16xf32> to vector<16xf32>
    %133 = vector.shape_cast %132 : vector<16xf32> to vector<16x1xf32>
    %134 = vector.broadcast %133 : vector<16x1xf32> to vector<16x16xf32>
    %135 = arith.subf %131, %134 : vector<16x16xf32>
    %136 = math.exp %135 : vector<16x16xf32>
    %cst_40 = arith.constant dense<0.000000e+00> : vector<16xf32>
    %137 = vector.multi_reduction <add>, %136, %cst_40 [1] : vector<16x16xf32> to vector<16xf32>
    %138 = vector.shape_cast %137 : vector<16xf32> to vector<16x1xf32>
    %139 = vector.broadcast %138 : vector<16x1xf32> to vector<16x16xf32>
    %140 = arith.divf %136, %139 : vector<16x16xf32>
    %141 = vector.extract_strided_slice %33 {offsets = [0, 96], sizes = [16, 32], strides = [1, 1]} : vector<16x128xf32> to vector<16x32xf32>
    %cst_41 = arith.constant dense<0.000000e+00> : vector<16x32xf32>
    %142 = tpu.matmul %140, %141, %cst_41 {dimension_numbers = #tpu.dot_dimension_numbers<[1], [0], [0], [1], [0, 0, 1, 1], [], []>} : vector<16x16xf32>, vector<16x32xf32>, vector<16x32xf32> -> vector<16x32xf32>
    %143 = arith.addf %118, %142 : vector<16x32xf32>
    %144 = vector.broadcast %10 : vector<1x32xf32> to vector<16x32xf32>
    %145 = arith.addf %143, %144 : vector<16x32xf32>
    %146 = arith.addf %0, %145 : vector<16x32xf32>
    %cst_42 = arith.constant dense<0.000000e+00> : vector<16xf32>
    %147 = vector.multi_reduction <add>, %146, %cst_42 [1] : vector<16x32xf32> to vector<16xf32>
    %148 = vector.shape_cast %147 : vector<16xf32> to vector<16x1xf32>
    %cst_43 = arith.constant 3.200000e+01 : f32
    %149 = vector.broadcast %cst_43 : f32 to vector<16x1xf32>
    %150 = arith.divf %148, %149 : vector<16x1xf32>
    %151 = vector.broadcast %150 : vector<16x1xf32> to vector<16x32xf32>
    %152 = arith.subf %146, %151 : vector<16x32xf32>
    %153 = arith.mulf %152, %152 : vector<16x32xf32>
    %cst_44 = arith.constant dense<0.000000e+00> : vector<16xf32>
    %154 = vector.multi_reduction <add>, %153, %cst_44 [1] : vector<16x32xf32> to vector<16xf32>
    %155 = vector.shape_cast %154 : vector<16xf32> to vector<16x1xf32>
    %cst_45 = arith.constant 3.200000e+01 : f32
    %156 = vector.broadcast %cst_45 : f32 to vector<16x1xf32>
    %157 = arith.divf %155, %156 : vector<16x1xf32>
    %cst_46 = arith.constant 9.99999974E-6 : f32
    %158 = vector.broadcast %cst_46 : f32 to vector<16x1xf32>
    %159 = arith.addf %157, %158 : vector<16x1xf32>
    %160 = math.rsqrt %159 : vector<16x1xf32>
    %161 = vector.broadcast %150 : vector<16x1xf32> to vector<16x32xf32>
    %162 = arith.subf %146, %161 : vector<16x32xf32>
    %163 = vector.broadcast %160 : vector<16x1xf32> to vector<16x32xf32>
    %164 = arith.mulf %162, %163 : vector<16x32xf32>
    %165 = vector.broadcast %6 : vector<1x32xf32> to vector<16x32xf32>
    %166 = arith.mulf %164, %165 : vector<16x32xf32>
    %167 = vector.broadcast %7 : vector<1x32xf32> to vector<16x32xf32>
    %168 = arith.addf %166, %167 : vector<16x32xf32>
    %c0_47 = arith.constant 0 : index
    %c0_48 = arith.constant 0 : index
    %169 = vector.load %arg4[%c0_47, %c0_48] : memref<32x128xf32, #tpu.memory_space<vmem>>, vector<32x128xf32>
    %cst_49 = arith.constant dense<0.000000e+00> : vector<16x128xf32>
    %170 = tpu.matmul %168, %169, %cst_49 {dimension_numbers = #tpu.dot_dimension_numbers<[1], [0], [0], [1], [0, 0, 1, 1], [], []>} : vector<16x32xf32>, vector<32x128xf32>, vector<16x128xf32> -> vector<16x128xf32>
    %171 = vector.broadcast %8 : vector<1x128xf32> to vector<16x128xf32>
    %172 = arith.addf %170, %171 : vector<16x128xf32>
    %cst_50 = arith.constant 5.000000e-01 : f32
    %173 = vector.broadcast %cst_50 : f32 to vector<16x128xf32>
    %174 = arith.mulf %173, %172 : vector<16x128xf32>
    %cst_51 = arith.constant 4.471500e-02 : f32
    %175 = vector.broadcast %cst_51 : f32 to vector<16x128xf32>
    %176 = arith.mulf %175, %172 : vector<16x128xf32>
    %177 = arith.mulf %176, %172 : vector<16x128xf32>
    %178 = arith.mulf %177, %172 : vector<16x128xf32>
    %179 = arith.addf %172, %178 : vector<16x128xf32>
    %cst_52 = arith.constant 0.797884583 : f32
    %180 = vector.broadcast %cst_52 : f32 to vector<16x128xf32>
    %181 = arith.mulf %180, %179 : vector<16x128xf32>
    %182 = math.tanh %181 : vector<16x128xf32>
    %cst_53 = arith.constant 1.000000e+00 : f32
    %183 = vector.broadcast %cst_53 : f32 to vector<16x128xf32>
    %184 = arith.addf %183, %182 : vector<16x128xf32>
    %185 = arith.mulf %174, %184 : vector<16x128xf32>
    %c0_54 = arith.constant 0 : index
    %c0_55 = arith.constant 0 : index
    %186 = vector.load %arg5[%c0_54, %c0_55] : memref<128x32xf32, #tpu.memory_space<vmem>>, vector<128x32xf32>
    %cst_56 = arith.constant dense<0.000000e+00> : vector<16x32xf32>
    %187 = tpu.matmul %185, %186, %cst_56 {dimension_numbers = #tpu.dot_dimension_numbers<[1], [0], [0], [1], [0, 0, 1, 1], [], []>} : vector<16x128xf32>, vector<128x32xf32>, vector<16x32xf32> -> vector<16x32xf32>
    %188 = vector.broadcast %9 : vector<1x32xf32> to vector<16x32xf32>
    %189 = arith.addf %187, %188 : vector<16x32xf32>
    %190 = arith.addf %146, %189 : vector<16x32xf32>
    %c0_57 = arith.constant 0 : index
    %c0_58 = arith.constant 0 : index
    %191 = vector.load %arg6[%c0_57, %c0_58] : memref<16x32xf32, #tpu.memory_space<vmem>>, vector<16x32xf32>
    tpu.vector_store %arg6[%c0_57, %c0_58], %190 {strides = array<i32>} : memref<16x32xf32, #tpu.memory_space<vmem>>, vector<16x32xf32>,
    return
  }
}

</mosaic_0001>

<llo_original>
// kernel: gpt2_block.1
$region0: #{gpt2_block.1}
  #allocation0 [shape = 'u32[]', space=smem, size = 0x4, offset = 0x4, fixed_abs, tag = 'smem constant byte address 0x4 - core index']
  #allocation1 [shape = 'u32[72,128]{1,0:T(1,128)}', space=vmem, size = 0x9000, scoped, tag = 'internal scratch']
  %s0 = inlined_call_operand.vmem [shape: f32[16,32], index: 0, kind: input, shape index: {}]
  %s1 = inlined_call_operand.vmem [shape: f32[16,128], index: 1, kind: input, shape index: {}]
  %s2 = inlined_call_operand.vmem [shape: f32[256,8], index: 2, kind: input, shape index: {}]
  %s3 = inlined_call_operand.vmem [shape: f32[32,128], index: 3, kind: input, shape index: {}]
  %s4 = inlined_call_operand.vmem [shape: f32[32,128], index: 4, kind: input, shape index: {}]
  %s5 = inlined_call_operand.vmem [shape: f32[128,32], index: 5, kind: input, shape index: {}]
  %s6 = inlined_call_operand.hbm [shape: f32[16,32], index: 6, kind: output, shape index: {}]
  %s7 = sld [smem:[#allocation0]]
  $region34: #{gpt2_block.1} parent=0
    _
  %s9 = ssub.s32 1, %s7
  %s10 = scalar_select 0, %s9, %s7
  $region1: #{gpt2_block.1} parent=0
    #allocation2 [shape = 'u8[8192]{0}', space=vmem, size = 0x2000, scoped, tag = 'output window, operand 0, single buffered']
    #allocation3 [shape = 's32[1]{0}', space=sflag, size = 0x4, scoped, tag = 'scoped memory for gpt2_block.1']
    %11 = vsyncpa [#allocation3], 0
    // Predicated region
    $region2: #{gpt2_block.1} parent=1 // pred_check
      _
    $region3: #{gpt2_block.1} parent=1 // pred_check_branch
      %13 = sbr.rel (0) target = $region5
    $region4: #{gpt2_block.1} parent=1 // pred_region
      _
    $region5: #{gpt2_block.1} parent=1 // pred_fallthru
      _
    // Predicated region
    $region6: #{gpt2_block.1} parent=1 // pred_check
      _
    $region7: #{gpt2_block.1} parent=1 // pred_check_branch
      %15 = sbr.rel (0) target = $region9
    $region8: #{gpt2_block.1} parent=1 // pred_region
      _
    $region9: #{gpt2_block.1} parent=1 // pred_fallthru
      _
    // Predicated region
    $region10: #{gpt2_block.1} parent=1 // pred_check
      _
    $region11: #{gpt2_block.1} parent=1 // pred_check_branch
      %17 = sbr.rel (0) target = $region13
    $region12: #{gpt2_block.1} parent=1 // pred_region
      _
    $region13: #{gpt2_block.1} parent=1 // pred_fallthru
      _
    // Predicated region
    $region14: #{gpt2_block.1} parent=1 // pred_check
      _
    $region15: #{gpt2_block.1} parent=1 // pred_check_branch
      %19 = sbr.rel (0) target = $region17
    $region16: #{gpt2_block.1} parent=1 // pred_region
      _
    $region17: #{gpt2_block.1} parent=1 // pred_fallthru
      _
    // Predicated region
    $region18: #{gpt2_block.1} parent=1 // pred_check
      _
    $region19: #{gpt2_block.1} parent=1 // pred_check_branch
      %21 = sbr.rel (0) target = $region21
    $region20: #{gpt2_block.1} parent=1 // pred_region
      _
    $region21: #{gpt2_block.1} parent=1 // pred_fallthru
      _
    // Predicated region
    $region22: #{gpt2_block.1} parent=1 // pred_check
      _
    $region23: #{gpt2_block.1} parent=1 // pred_check_branch
      %23 = sbr.rel (0) target = $region25
    $region24: #{gpt2_block.1} parent=1 // pred_region
      _
    $region25: #{gpt2_block.1} parent=1 // pred_fallthru
      _
    %v24 = vld [vmem:[%s0] sm:$0xff]
    %v25 = vld [vmem:[%s0 + $0x8] sm:$0xff]
    %v26 = vld [vmem:[%s1] sm:$0xff]
    %v27 = vld [vmem:[%s1 + $0x8] sm:$0xff]
    %v28 = vld [vmem:[%s2] sm:$0xff]
    %v29 = vld [vmem:[%s2 + $0x8] sm:$0xff]
    %v30 = vld [vmem:[%s2 + $0x10] sm:$0xff]
    %v31 = vld [vmem:[%s2 + $0x18] sm:$0xff]
    %v32 = vld [vmem:[%s2 + $0x20] sm:$0xff]
    %v33 = vld [vmem:[%s2 + $0x28] sm:$0xff]
    %v34 = vld [vmem:[%s2 + $0x30] sm:$0xff]
    %v35 = vld [vmem:[%s2 + $0x38] sm:$0xff]
    %v36 = vld [vmem:[%s2 + $0x40] sm:$0xff]
    %v37 = vld [vmem:[%s2 + $0x48] sm:$0xff]
    %v38 = vld [vmem:[%s2 + $0x50] sm:$0xff]
    %v39 = vld [vmem:[%s2 + $0x58] sm:$0xff]
    %v40 = vld [vmem:[%s2 + $0x60] sm:$0xff]
    %v41 = vld [vmem:[%s2 + $0x68] sm:$0xff]
    %v42 = vld [vmem:[%s2 + $0x70] sm:$0xff]
    %v43 = vld [vmem:[%s2 + $0x78] sm:$0xff]
    %v44 = vld [vmem:[%s2 + $0x80] sm:$0xff]
    %v45 = vld [vmem:[%s2 + $0x88] sm:$0xff]
    %v46 = vld [vmem:[%s2 + $0x90] sm:$0xff]
    %v47 = vld [vmem:[%s2 + $0x98] sm:$0xff]
    %v48 = vld [vmem:[%s2 + $0xa0] sm:$0xff]
    %v49 = vld [vmem:[%s2 + $0xa8] sm:$0xff]
    %v50 = vld [vmem:[%s2 + $0xb0] sm:$0xff]
    %v51 = vld [vmem:[%s2 + $0xb8] sm:$0xff]
    %v52 = vld [vmem:[%s2 + $0xc0] sm:$0xff]
    %v53 = vld [vmem:[%s2 + $0xc8] sm:$0xff]
    %v54 = vld [vmem:[%s2 + $0xd0] sm:$0xff]
    %v55 = vld [vmem:[%s2 + $0xd8] sm:$0xff]
    %v56 = vld [vmem:[%s2 + $0xe0] sm:$0xff]
    %v57 = vld [vmem:[%s2 + $0xe8] sm:$0xff]
    %v58 = vld [vmem:[%s2 + $0xf0] sm:$0xff]
    %v59 = vld [vmem:[%s2 + $0xf8] sm:$0xff]
    %v60 = vld [vmem:[%s3] sm:$0xff]
    %v61 = vld [vmem:[%s3 + $0x8] sm:$0xff]
    %v62 = vld [vmem:[%s3 + $0x10] sm:$0xff]
    %v63 = vld [vmem:[%s3 + $0x18] sm:$0xff]
    %vm64 = vcmask 261120
    %v65 = vsel %vm64, %v24, 0.0
    %66 = vadd.xlane.f32.xlu0 %v65
    %v67 = vpop.xlane.xlu0 %66
    %v68 = vsel %vm64, %v25, 0.0
    %69 = vadd.xlane.f32.xlu0 %v68
    %v70 = vpop.xlane.xlu0 %69
    %v71 = vrcp.pop 32.0
    %v72 = vmul.f32 32.0, %v71
    %v73 = vsub.f32 1.0, %v72
    %v74 = vmul.f32 %v71, %v73
    %v75 = vadd.f32 %v71, %v74
    %vm76 = vweird.f32 %v71
    %v77 = vsel %vm76, %v71, %v75
    %v78 = vmul.f32 %v67, %v77
    %v79 = vmul.f32 %v70, %v77
    %v80 = vsub.f32 %v24, %v78
    %v81 = vsub.f32 %v25, %v79
    %v82 = vmul.f32 %v80, %v80
    %v83 = vmul.f32 %v81, %v81
    %v84 = vsel %vm64, %v82, 0.0
    %85 = vadd.xlane.f32.xlu0 %v84
    %v86 = vpop.xlane.xlu0 %85
    %v87 = vsel %vm64, %v83, 0.0
    %88 = vadd.xlane.f32.xlu0 %v87
    %v89 = vpop.xlane.xlu0 %88
    %v90 = vmul.f32 %v86, %v77
    %v91 = vmul.f32 %v89, %v77
    %v92 = vadd.f32 %v90, 1e-05
    %v93 = vadd.f32 %v91, 1e-05
    %v94 = vrsqrt.pop %v92
    %v95 = vmul.f32 %v94, %v92
    %v96 = vmul.f32 %v95, %v94
    %v97 = vmul.f32 0.5, %v96
    %v98 = vsub.f32 1.5, %v97
    %v99 = vmul.f32 %v94, %v98
    %vm100 = vweird.f32 %v92
    %vm101 = vweird.f32 %v94
    %vm102 = vmor %vm100, %vm101
    %v103 = vsel %vm102, %v94, %v99
    %v104 = vrsqrt.pop %v93
    %v105 = vmul.f32 %v104, %v93
    %v106 = vmul.f32 %v105, %v104
    %v107 = vmul.f32 0.5, %v106
    %v108 = vsub.f32 1.5, %v107
    %v109 = vmul.f32 %v104, %v108
    %vm110 = vweird.f32 %v93
    %vm111 = vweird.f32 %v104
    %vm112 = vmor %vm110, %vm111
    %v113 = vsel %vm112, %v104, %v109
    %v114 = vmul.f32 %v80, %v103
    %v115 = vmul.f32 %v81, %v113
    %v116 = vperm.slane %v26, 0
    %v117 = vmul.f32 %v114, %v116
    %v118 = vmul.f32 %v115, %v116
    %v119 = vperm.slane %v26, 1
    %v120 = vadd.f32 %v117, %v119
    %v121 = vadd.f32 %v118, %v119
    %v123 = vsel %vm64, %v120, 0
    %v126 = vsel %vm64, %v121, 0
    %128 = vmatpush.msra.mxu0 0.0
    %129 = vmatpush.msra.mxu0 0.0
    %130 = vmatpush.msra.mxu0 0.0
    %131 = vmatpush.msra.mxu0 0.0
    %132 = vmatpush.msra.mxu0 0.0
    %133 = vmatpush.msra.mxu0 0.0
    %134 = vmatpush.msra.mxu0 0.0
    %135 = vmatpush.msra.mxu0 0.0
    %136 = vmatpush.msra.mxu0 0.0
    %137 = vmatpush.msra.mxu0 0.0
    %138 = vmatpush.msra.mxu0 0.0
    %139 = vmatpush.msra.mxu0 0.0
    %140 = vmatpush.msra.mxu0 %v63
    %141 = vmatpush.msra.mxu0 %v62
    %142 = vmatpush.msra.mxu0 %v61
    %143 = vmatpush.msra.mxu0 %v60
    %144 = vmatmul.f32.gmra.mxu0 %v123
    %v145 = vpop.f32.mrf.mxu0
    %v146 = vadd.f32 0.0, %v145
    %147 = vmatmul.f32.gmra.mxu0 %v126
    %v148 = vpop.f32.mrf.mxu0
    %v149 = vadd.f32 0.0, %v148
    %150 = vdwg.mxu0
    %v151 = vlaneseq
    %v152 = vshrl.u32 %v151, 7
    %v153 = vadd.s32 %v152, 8
    %v154 = vlaneseq
    %v155 = vand.u32 %v154, 127
    %v156 = vand.u32 %v152, 4294967288
    %v157 = vand.u32 %v153, 4294967288
    %v158 = vand.u32 %v155, 4294967288
    %vm159 = vcmp.eq.s32.totalorder %v156, %v158
    %vm160 = vcmp.eq.s32.totalorder %v157, %v158
    %vm161 = vcmp.ge.s32.totalorder %v152, %v155
    %vm162 = vcmp.ge.s32.totalorder %v153, %v155
    %vm163 = vmand %vm159, %vm161
    %vm164 = vmand %vm160, %vm162
    %v165 = vperm.slane %v26, 7
    %166 = vmatpush.msra.mxu0 0.0
    %167 = vmatpush.msra.mxu0 0.0
    %168 = vmatpush.msra.mxu0 0.0
    %169 = vmatpush.msra.mxu0 0.0
    %170 = vmatpush.msra.mxu0 0.0
    %171 = vmatpush.msra.mxu0 0.0
    %172 = vmatpush.msra.mxu0 0.0
    %173 = vmatpush.msra.mxu0 0.0
    %174 = vmatpush.msra.mxu0 0.0
    %175 = vmatpush.msra.mxu0 0.0
    %176 = vmatpush.msra.mxu0 0.0
    %177 = vmatpush.msra.mxu0 0.0
    %178 = vmatpush.msra.mxu0 %v31
    %179 = vmatpush.msra.mxu0 %v30
    %180 = vmatpush.msra.mxu0 %v29
    %181 = vmatpush.msra.mxu0 %v28
    %182 = vmatmul.f32.gmra.mxu0 %v123
    %v183 = vpop.f32.mrf.mxu0
    %v184 = vadd.f32 %v165, %v183
    %185 = vmatmul.f32.gmra.mxu0 %v126
    %v186 = vpop.f32.mrf.mxu0
    %v187 = vadd.f32 %v165, %v186
    %188 = vdwg.mxu0
    %v189 = vperm.slane %v27, 3
    %190 = vmatpush.msra.mxu0 0.0
    %191 = vmatpush.msra.mxu0 0.0
    %192 = vmatpush.msra.mxu0 0.0
    %193 = vmatpush.msra.mxu0 0.0
    %194 = vmatpush.msra.mxu0 0.0
    %195 = vmatpush.msra.mxu0 0.0
    %196 = vmatpush.msra.mxu0 0.0
    %197 = vmatpush.msra.mxu0 0.0
    %198 = vmatpush.msra.mxu0 0.0
    %199 = vmatpush.msra.mxu0 0.0
    %200 = vmatpush.msra.mxu0 0.0
    %201 = vmatpush.msra.mxu0 0.0
    %202 = vmatpush.msra.mxu0 %v47
    %203 = vmatpush.msra.mxu0 %v46
    %204 = vmatpush.msra.mxu0 %v45
    %205 = vmatpush.msra.mxu0 %v44
    %206 = vmatmul.f32.gmra.mxu0 %v123
    %v207 = vpop.f32.mrf.mxu0
    %v208 = vadd.f32 %v189, %v207
    %209 = vmatmul.f32.gmra.mxu0 %v126
    %v210 = vpop.f32.mrf.mxu0
    %v211 = vadd.f32 %v189, %v210
    %212 = vdwg.mxu0
    %vm213 = vcmask 64512
    %v215 = vsel %vm213, %v184, 0
    %v218 = vsel %vm213, %v187, 0
    %v221 = vsel %vm213, %v208, 0
    %v224 = vsel %vm213, %v211, 0
    %226 = vmatpush.xpose.msra.mxu0 0.0
    %227 = vmatpush.xpose.msra.mxu0 0.0
    %228 = vmatpush.xpose.msra.mxu0 0.0
    %229 = vmatpush.xpose.msra.mxu0 0.0
    %230 = vmatpush.xpose.msra.mxu0 0.0
    %231 = vmatpush.xpose.msra.mxu0 0.0
    %232 = vmatpush.xpose.msra.mxu0 0.0
    %233 = vmatpush.xpose.msra.mxu0 0.0
    %234 = vmatpush.xpose.msra.mxu0 0.0
    %235 = vmatpush.xpose.msra.mxu0 0.0
    %236 = vmatpush.xpose.msra.mxu0 0.0
    %237 = vmatpush.xpose.msra.mxu0 0.0
    %238 = vmatpush.xpose.msra.mxu0 0.0
    %239 = vmatpush.xpose.msra.mxu0 0.0
    %240 = vmatpush.xpose.msra.mxu0 %v224
    %241 = vmatpush.xpose.msra.mxu0 %v221
    %242 = vmatmul.f32.gmra.mxu0 %v215
    %v243 = vpop.f32.mrf.mxu0
    %v244 = vadd.f32 0.0, %v243
    %245 = vmatmul.f32.gmra.mxu0 %v218
    %v246 = vpop.f32.mrf.mxu0
    %v247 = vadd.f32 0.0, %v246
    %248 = vdwg.mxu0
    %v249 = vsel %vm163, %v244, -10000.0
    %v250 = vsel %vm164, %v247, -10000.0
    %vm251 = vcmask 130048
    %v252 = vsel %vm251, %v249, -inf
    %253 = vmax.xlane.f32.xlu0 %v252
    %v254 = vpop.xlane.xlu0 %253
    %v255 = vsel %vm251, %v250, -inf
    %256 = vmax.xlane.f32.xlu0 %v255
    %v257 = vpop.xlane.xlu0 %256
    %v258 = vsub.f32 %v249, %v254
    %v259 = vsub.f32 %v250, %v257
    %v260 = vmul.f32 %v258, 1.442695
    %v261 = vpow.pop %v260
    %v262 = vmul.f32 %v259, 1.442695
    %v263 = vpow.pop %v262
    %v264 = vsel %vm251, %v261, 0.0
    %265 = vadd.xlane.f32.xlu0 %v264
    %v266 = vpop.xlane.xlu0 %265
    %v267 = vsel %vm251, %v263, 0.0
    %268 = vadd.xlane.f32.xlu0 %v267
    %v269 = vpop.xlane.xlu0 %268
    %v270 = vrcp.pop %v266
    %v271 = vmul.f32 %v266, %v270
    %v272 = vsub.f32 1.0, %v271
    %v273 = vmul.f32 %v270, %v272
    %v274 = vadd.f32 %v270, %v273
    %vm275 = vweird.f32 %v266
    %vm276 = vweird.f32 %v270
    %vm277 = vmor %vm275, %vm276
    %v278 = vsel %vm277, %v270, %v274
    %v279 = vand.u32 2147483647, %v266
    %vm280 = vcmp.eq.f32.partialorder %v279, 8.507059e+37
    %v281 = vand.u32 %v266, 2147483648
    %v282 = vor.u32 1.1754944e-38, %v281
    %v283 = vsel %vm280, %v282, %v278
    %v284 = vmul.f32 %v261, %v283
    %v285 = vrcp.pop %v269
    %v286 = vmul.f32 %v269, %v285
    %v287 = vsub.f32 1.0, %v286
    %v288 = vmul.f32 %v285, %v287
    %v289 = vadd.f32 %v285, %v288
    %vm290 = vweird.f32 %v269
    %vm291 = vweird.f32 %v285
    %vm292 = vmor %vm290, %vm291
    %v293 = vsel %vm292, %v285, %v289
    %v294 = vand.u32 2147483647, %v269
    %vm295 = vcmp.eq.f32.partialorder %v294, 8.507059e+37
    %v296 = vand.u32 %v269, 2147483648
    %v297 = vor.u32 1.1754944e-38, %v296
    %v298 = vsel %vm295, %v297, %v293
    %v299 = vmul.f32 %v263, %v298
    %v300 = vperm.slane %v27, 0
    %301 = vmatpush.msra.mxu0 0.0
    %302 = vmatpush.msra.mxu0 0.0
    %303 = vmatpush.msra.mxu0 0.0
    %304 = vmatpush.msra.mxu0 0.0
    %305 = vmatpush.msra.mxu0 0.0
    %306 = vmatpush.msra.mxu0 0.0
    %307 = vmatpush.msra.mxu0 0.0
    %308 = vmatpush.msra.mxu0 0.0
    %309 = vmatpush.msra.mxu0 0.0
    %310 = vmatpush.msra.mxu0 0.0
    %311 = vmatpush.msra.mxu0 0.0
    %312 = vmatpush.msra.mxu0 0.0
    %313 = vmatpush.msra.mxu0 %v35
    %314 = vmatpush.msra.mxu0 %v34
    %315 = vmatpush.msra.mxu0 %v33
    %316 = vmatpush.msra.mxu0 %v32
    %317 = vmatmul.f32.gmra.mxu0 %v123
    %v318 = vpop.f32.mrf.mxu0
    %v319 = vadd.f32 %v300, %v318
    %320 = vmatmul.f32.gmra.mxu0 %v126
    %v321 = vpop.f32.mrf.mxu0
    %v322 = vadd.f32 %v300, %v321
    %323 = vdwg.mxu0
    %v324 = vperm.slane %v27, 4
    %325 = vmatpush.msra.mxu0 0.0
    %326 = vmatpush.msra.mxu0 0.0
    %327 = vmatpush.msra.mxu0 0.0
    %328 = vmatpush.msra.mxu0 0.0
    %329 = vmatpush.msra.mxu0 0.0
    %330 = vmatpush.msra.mxu0 0.0
    %331 = vmatpush.msra.mxu0 0.0
    %332 = vmatpush.msra.mxu0 0.0
    %333 = vmatpush.msra.mxu0 0.0
    %334 = vmatpush.msra.mxu0 0.0
    %335 = vmatpush.msra.mxu0 0.0
    %336 = vmatpush.msra.mxu0 0.0
    %337 = vmatpush.msra.mxu0 %v51
    %338 = vmatpush.msra.mxu0 %v50
    %339 = vmatpush.msra.mxu0 %v49
    %340 = vmatpush.msra.mxu0 %v48
    %341 = vmatmul.f32.gmra.mxu0 %v123
    %v342 = vpop.f32.mrf.mxu0
    %v343 = vadd.f32 %v324, %v342
    %344 = vmatmul.f32.gmra.mxu0 %v126
    %v345 = vpop.f32.mrf.mxu0
    %v346 = vadd.f32 %v324, %v345
    %347 = vdwg.mxu0
    %v349 = vsel %vm213, %v319, 0
    %v352 = vsel %vm213, %v322, 0
    %v355 = vsel %vm213, %v343, 0
    %v358 = vsel %vm213, %v346, 0
    %360 = vmatpush.xpose.msra.mxu0 0.0
    %361 = vmatpush.xpose.msra.mxu0 0.0
    %362 = vmatpush.xpose.msra.mxu0 0.0
    %363 = vmatpush.xpose.msra.mxu0 0.0
    %364 = vmatpush.xpose.msra.mxu0 0.0
    %365 = vmatpush.xpose.msra.mxu0 0.0
    %366 = vmatpush.xpose.msra.mxu0 0.0
    %367 = vmatpush.xpose.msra.mxu0 0.0
    %368 = vmatpush.xpose.msra.mxu0 0.0
    %369 = vmatpush.xpose.msra.mxu0 0.0
    %370 = vmatpush.xpose.msra.mxu0 0.0
    %371 = vmatpush.xpose.msra.mxu0 0.0
    %372 = vmatpush.xpose.msra.mxu0 0.0
    %373 = vmatpush.xpose.msra.mxu0 0.0
    %374 = vmatpush.xpose.msra.mxu0 %v358
    %375 = vmatpush.xpose.msra.mxu0 %v355
    %376 = vmatmul.f32.gmra.mxu0 %v349
    %v377 = vpop.f32.mrf.mxu0
    %v378 = vadd.f32 0.0, %v377
    %379 = vmatmul.f32.gmra.mxu0 %v352
    %v380 = vpop.f32.mrf.mxu0
    %v381 = vadd.f32 0.0, %v380
    %382 = vdwg.mxu0
    %v383 = vsel %vm163, %v378, -10000.0
    %v384 = vsel %vm164, %v381, -10000.0
    %v385 = vsel %vm251, %v383, -inf
    %386 = vmax.xlane.f32.xlu0 %v385
    %v387 = vpop.xlane.xlu0 %386
    %v388 = vsel %vm251, %v384, -inf
    %389 = vmax.xlane.f32.xlu0 %v388
    %v390 = vpop.xlane.xlu0 %389
    %v391 = vsub.f32 %v383, %v387
    %v392 = vsub.f32 %v384, %v390
    %v393 = vmul.f32 %v391, 1.442695
    %v394 = vpow.pop %v393
    %v395 = vmul.f32 %v392, 1.442695
    %v396 = vpow.pop %v395
    %v397 = vsel %vm251, %v394, 0.0
    %398 = vadd.xlane.f32.xlu0 %v397
    %v399 = vpop.xlane.xlu0 %398
    %v400 = vsel %vm251, %v396, 0.0
    %401 = vadd.xlane.f32.xlu0 %v400
    %v402 = vpop.xlane.xlu0 %401
    %v403 = vrcp.pop %v399
    %v404 = vmul.f32 %v399, %v403
    %v405 = vsub.f32 1.0, %v404
    %v406 = vmul.f32 %v403, %v405
    %v407 = vadd.f32 %v403, %v406
    %vm408 = vweird.f32 %v399
    %vm409 = vweird.f32 %v403
    %vm410 = vmor %vm408, %vm409
    %v411 = vsel %vm410, %v403, %v407
    %v412 = vand.u32 2147483647, %v399
    %vm413 = vcmp.eq.f32.partialorder %v412, 8.507059e+37
    %v414 = vand.u32 %v399, 2147483648
    %v415 = vor.u32 1.1754944e-38, %v414
    %v416 = vsel %vm413, %v415, %v411
    %v417 = vmul.f32 %v394, %v416
    %v418 = vrcp.pop %v402
    %v419 = vmul.f32 %v402, %v418
    %v420 = vsub.f32 1.0, %v419
    %v421 = vmul.f32 %v418, %v420
    %v422 = vadd.f32 %v418, %v421
    %vm423 = vweird.f32 %v402
    %vm424 = vweird.f32 %v418
    %vm425 = vmor %vm423, %vm424
    %v426 = vsel %vm425, %v418, %v422
    %v427 = vand.u32 2147483647, %v402
    %vm428 = vcmp.eq.f32.partialorder %v427, 8.507059e+37
    %v429 = vand.u32 %v402, 2147483648
    %v430 = vor.u32 1.1754944e-38, %v429
    %v431 = vsel %vm428, %v430, %v426
    %v432 = vmul.f32 %v396, %v431
    %435 = vrot.lane.b32.xlu0 %v146, 96
    %v436 = vpop.permute.xlu0 %435
    %437 = vrot.lane.b32.xlu0 %v149, 96
    %v438 = vpop.permute.xlu0 %437
    %v442 = vsel %vm251, %v417, 0
    %v445 = vsel %vm251, %v432, 0
    %447 = vmatpush.msra.mxu0 0.0
    %448 = vmatpush.msra.mxu0 0.0
    %449 = vmatpush.msra.mxu0 0.0
    %450 = vmatpush.msra.mxu0 0.0
    %451 = vmatpush.msra.mxu0 0.0
    %452 = vmatpush.msra.mxu0 0.0
    %453 = vmatpush.msra.mxu0 0.0
    %454 = vmatpush.msra.mxu0 0.0
    %455 = vmatpush.msra.mxu0 0.0
    %456 = vmatpush.msra.mxu0 0.0
    %457 = vmatpush.msra.mxu0 0.0
    %458 = vmatpush.msra.mxu0 0.0
    %459 = vmatpush.msra.mxu0 0.0
    %460 = vmatpush.msra.mxu0 0.0
    %461 = vmatpush.msra.mxu0 %v438
    %462 = vmatpush.msra.mxu0 %v436
    %463 = vmatmul.f32.gmra.mxu0 %v442
    %v464 = vpop.f32.mrf.mxu0
    %v465 = vadd.f32 0.0, %v464
    %466 = vmatmul.f32.gmra.mxu0 %v445
    %v467 = vpop.f32.mrf.mxu0
    %v468 = vadd.f32 0.0, %v467
    %469 = vdwg.mxu0
    %v471 = vsel %vm251, %v284, 0
    %v474 = vsel %vm251, %v299, 0
    %476 = vmatpush.msra.mxu0 0.0
    %477 = vmatpush.msra.mxu0 0.0
    %478 = vmatpush.msra.mxu0 0.0
    %479 = vmatpush.msra.mxu0 0.0
    %480 = vmatpush.msra.mxu0 0.0
    %481 = vmatpush.msra.mxu0 0.0
    %482 = vmatpush.msra.mxu0 0.0
    %483 = vmatpush.msra.mxu0 0.0
    %484 = vmatpush.msra.mxu0 0.0
    %485 = vmatpush.msra.mxu0 0.0
    %486 = vmatpush.msra.mxu0 0.0
    %487 = vmatpush.msra.mxu0 0.0
    %488 = vmatpush.msra.mxu0 0.0
    %489 = vmatpush.msra.mxu0 0.0
    %490 = vmatpush.msra.mxu0 %v149
    %491 = vmatpush.msra.mxu0 %v146
    %492 = vmatmul.f32.gmra.mxu0 %v471
    %v493 = vpop.f32.mrf.mxu0
    %v494 = vadd.f32 %v465, %v493
    %495 = vmatmul.f32.gmra.mxu0 %v474
    %v496 = vpop.f32.mrf.mxu0
    %v497 = vadd.f32 %v468, %v496
    %498 = vdwg.mxu0
    %v499 = vperm.slane %v27, 1
    %500 = vmatpush.msra.mxu0 0.0
    %501 = vmatpush.msra.mxu0 0.0
    %502 = vmatpush.msra.mxu0 0.0
    %503 = vmatpush.msra.mxu0 0.0
    %504 = vmatpush.msra.mxu0 0.0
    %505 = vmatpush.msra.mxu0 0.0
    %506 = vmatpush.msra.mxu0 0.0
    %507 = vmatpush.msra.mxu0 0.0
    %508 = vmatpush.msra.mxu0 0.0
    %509 = vmatpush.msra.mxu0 0.0
    %510 = vmatpush.msra.mxu0 0.0
    %511 = vmatpush.msra.mxu0 0.0
    %512 = vmatpush.msra.mxu0 %v39
    %513 = vmatpush.msra.mxu0 %v38
    %514 = vmatpush.msra.mxu0 %v37
    %515 = vmatpush.msra.mxu0 %v36
    %516 = vmatmul.f32.gmra.mxu0 %v123
    %v517 = vpop.f32.mrf.mxu0
    %v518 = vadd.f32 %v499, %v517
    %519 = vmatmul.f32.gmra.mxu0 %v126
    %v520 = vpop.f32.mrf.mxu0
    %v521 = vadd.f32 %v499, %v520
    %522 = vdwg.mxu0
    %v523 = vperm.slane %v27, 5
    %524 = vmatpush.msra.mxu0 0.0
    %525 = vmatpush.msra.mxu0 0.0
    %526 = vmatpush.msra.mxu0 0.0
    %527 = vmatpush.msra.mxu0 0.0
    %528 = vmatpush.msra.mxu0 0.0
    %529 = vmatpush.msra.mxu0 0.0
    %530 = vmatpush.msra.mxu0 0.0
    %531 = vmatpush.msra.mxu0 0.0
    %532 = vmatpush.msra.mxu0 0.0
    %533 = vmatpush.msra.mxu0 0.0
    %534 = vmatpush.msra.mxu0 0.0
    %535 = vmatpush.msra.mxu0 0.0
    %536 = vmatpush.msra.mxu0 %v55
    %537 = vmatpush.msra.mxu0 %v54
    %538 = vmatpush.msra.mxu0 %v53
    %539 = vmatpush.msra.mxu0 %v52
    %540 = vmatmul.f32.gmra.mxu0 %v123
    %v541 = vpop.f32.mrf.mxu0
    %v542 = vadd.f32 %v523, %v541
    %543 = vmatmul.f32.gmra.mxu0 %v126
    %v544 = vpop.f32.mrf.mxu0
    %v545 = vadd.f32 %v523, %v544
    %546 = vdwg.mxu0
    %v548 = vsel %vm213, %v518, 0
    %v551 = vsel %vm213, %v521, 0
    %v554 = vsel %vm213, %v542, 0
    %v557 = vsel %vm213, %v545, 0
    %559 = vmatpush.xpose.msra.mxu0 0.0
    %560 = vmatpush.xpose.msra.mxu0 0.0
    %561 = vmatpush.xpose.msra.mxu0 0.0
    %562 = vmatpush.xpose.msra.mxu0 0.0
    %563 = vmatpush.xpose.msra.mxu0 0.0
    %564 = vmatpush.xpose.msra.mxu0 0.0
    %565 = vmatpush.xpose.msra.mxu0 0.0
    %566 = vmatpush.xpose.msra.mxu0 0.0
    %567 = vmatpush.xpose.msra.mxu0 0.0
    %568 = vmatpush.xpose.msra.mxu0 0.0
    %569 = vmatpush.xpose.msra.mxu0 0.0
    %570 = vmatpush.xpose.msra.mxu0 0.0
    %571 = vmatpush.xpose.msra.mxu0 0.0
    %572 = vmatpush.xpose.msra.mxu0 0.0
    %573 = vmatpush.xpose.msra.mxu0 %v557
    %574 = vmatpush.xpose.msra.mxu0 %v554
    %575 = vmatmul.f32.gmra.mxu0 %v548
    %v576 = vpop.f32.mrf.mxu0
    %v577 = vadd.f32 0.0, %v576
    %578 = vmatmul.f32.gmra.mxu0 %v551
    %v579 = vpop.f32.mrf.mxu0
    %v580 = vadd.f32 0.0, %v579
    %581 = vdwg.mxu0
    %v582 = vsel %vm163, %v577, -10000.0
    %v583 = vsel %vm164, %v580, -10000.0
    %v584 = vsel %vm251, %v582, -inf
    %585 = vmax.xlane.f32.xlu0 %v584
    %v586 = vpop.xlane.xlu0 %585
    %v587 = vsel %vm251, %v583, -inf
    %588 = vmax.xlane.f32.xlu0 %v587
    %v589 = vpop.xlane.xlu0 %588
    %v590 = vsub.f32 %v582, %v586
    %v591 = vsub.f32 %v583, %v589
    %v592 = vmul.f32 %v590, 1.442695
    %v593 = vpow.pop %v592
    %v594 = vmul.f32 %v591, 1.442695
    %v595 = vpow.pop %v594
    %v596 = vsel %vm251, %v593, 0.0
    %597 = vadd.xlane.f32.xlu0 %v596
    %v598 = vpop.xlane.xlu0 %597
    %v599 = vsel %vm251, %v595, 0.0
    %600 = vadd.xlane.f32.xlu0 %v599
    %v601 = vpop.xlane.xlu0 %600
    %v602 = vrcp.pop %v598
    %v603 = vmul.f32 %v598, %v602
    %v604 = vsub.f32 1.0, %v603
    %v605 = vmul.f32 %v602, %v604
    %v606 = vadd.f32 %v602, %v605
    %vm607 = vweird.f32 %v598
    %vm608 = vweird.f32 %v602
    %vm609 = vmor %vm607, %vm608
    %v610 = vsel %vm609, %v602, %v606
    %v611 = vand.u32 2147483647, %v598
    %vm612 = vcmp.eq.f32.partialorder %v611, 8.507059e+37
    %v613 = vand.u32 %v598, 2147483648
    %v614 = vor.u32 1.1754944e-38, %v613
    %v615 = vsel %vm612, %v614, %v610
    %v616 = vmul.f32 %v593, %v615
    %v617 = vrcp.pop %v601
    %v618 = vmul.f32 %v601, %v617
    %v619 = vsub.f32 1.0, %v618
    %v620 = vmul.f32 %v617, %v619
    %v621 = vadd.f32 %v617, %v620
    %vm622 = vweird.f32 %v601
    %vm623 = vweird.f32 %v617
    %vm624 = vmor %vm622, %vm623
    %v625 = vsel %vm624, %v617, %v621
    %v626 = vand.u32 2147483647, %v601
    %vm627 = vcmp.eq.f32.partialorder %v626, 8.507059e+37
    %v628 = vand.u32 %v601, 2147483648
    %v629 = vor.u32 1.1754944e-38, %v628
    %v630 = vsel %vm627, %v629, %v625
    %v631 = vmul.f32 %v595, %v630
    %632 = vrot.lane.b32.xlu0 %v146, 64
    %v633 = vpop.permute.xlu0 %632
    %634 = vrot.lane.b32.xlu0 %v149, 64
    %v635 = vpop.permute.xlu0 %634
    %v639 = vsel %vm251, %v616, 0
    %v642 = vsel %vm251, %v631, 0
    %644 = vmatpush.msra.mxu0 0.0
    %645 = vmatpush.msra.mxu0 0.0
    %646 = vmatpush.msra.mxu0 0.0
    %647 = vmatpush.msra.mxu0 0.0
    %648 = vmatpush.msra.mxu0 0.0
    %649 = vmatpush.msra.mxu0 0.0
    %650 = vmatpush.msra.mxu0 0.0
    %651 = vmatpush.msra.mxu0 0.0
    %652 = vmatpush.msra.mxu0 0.0
    %653 = vmatpush.msra.mxu0 0.0
    %654 = vmatpush.msra.mxu0 0.0
    %655 = vmatpush.msra.mxu0 0.0
    %656 = vmatpush.msra.mxu0 0.0
    %657 = vmatpush.msra.mxu0 0.0
    %658 = vmatpush.msra.mxu0 %v635
    %659 = vmatpush.msra.mxu0 %v633
    %660 = vmatmul.f32.gmra.mxu0 %v639
    %v661 = vpop.f32.mrf.mxu0
    %v662 = vadd.f32 0.0, %v661
    %663 = vmatmul.f32.gmra.mxu0 %v642
    %v664 = vpop.f32.mrf.mxu0
    %v665 = vadd.f32 0.0, %v664
    %666 = vdwg.mxu0
    %v667 = vadd.f32 %v494, %v662
    %v668 = vadd.f32 %v497, %v665
    %v669 = vperm.slane %v27, 2
    %670 = vmatpush.msra.mxu0 0.0
    %671 = vmatpush.msra.mxu0 0.0
    %672 = vmatpush.msra.mxu0 0.0
    %673 = vmatpush.msra.mxu0 0.0
    %674 = vmatpush.msra.mxu0 0.0
    %675 = vmatpush.msra.mxu0 0.0
    %676 = vmatpush.msra.mxu0 0.0
    %677 = vmatpush.msra.mxu0 0.0
    %678 = vmatpush.msra.mxu0 0.0
    %679 = vmatpush.msra.mxu0 0.0
    %680 = vmatpush.msra.mxu0 0.0
    %681 = vmatpush.msra.mxu0 0.0
    %682 = vmatpush.msra.mxu0 %v43
    %683 = vmatpush.msra.mxu0 %v42
    %684 = vmatpush.msra.mxu0 %v41
    %685 = vmatpush.msra.mxu0 %v40
    %686 = vmatmul.f32.gmra.mxu0 %v123
    %v687 = vpop.f32.mrf.mxu0
    %v688 = vadd.f32 %v669, %v687
    %689 = vmatmul.f32.gmra.mxu0 %v126
    %v690 = vpop.f32.mrf.mxu0
    %v691 = vadd.f32 %v669, %v690
    %692 = vdwg.mxu0
    %v693 = vperm.slane %v27, 6
    %694 = vmatpush.msra.mxu0 0.0
    %695 = vmatpush.msra.mxu0 0.0
    %696 = vmatpush.msra.mxu0 0.0
    %697 = vmatpush.msra.mxu0 0.0
    %698 = vmatpush.msra.mxu0 0.0
    %699 = vmatpush.msra.mxu0 0.0
    %700 = vmatpush.msra.mxu0 0.0
    %701 = vmatpush.msra.mxu0 0.0
    %702 = vmatpush.msra.mxu0 0.0
    %703 = vmatpush.msra.mxu0 0.0
    %704 = vmatpush.msra.mxu0 0.0
    %705 = vmatpush.msra.mxu0 0.0
    %706 = vmatpush.msra.mxu0 %v59
    %707 = vmatpush.msra.mxu0 %v58
    %708 = vmatpush.msra.mxu0 %v57
    %709 = vmatpush.msra.mxu0 %v56
    %710 = vmatmul.f32.gmra.mxu0 %v123
    %v711 = vpop.f32.mrf.mxu0
    %v712 = vadd.f32 %v693, %v711
    %713 = vmatmul.f32.gmra.mxu0 %v126
    %v714 = vpop.f32.mrf.mxu0
    %v715 = vadd.f32 %v693, %v714
    %716 = vdwg.mxu0
    %v718 = vsel %vm213, %v688, 0
    %v721 = vsel %vm213, %v691, 0
    %v724 = vsel %vm213, %v712, 0
    %v727 = vsel %vm213, %v715, 0
    %729 = vmatpush.xpose.msra.mxu0 0.0
    %730 = vmatpush.xpose.msra.mxu0 0.0
    %731 = vmatpush.xpose.msra.mxu0 0.0
    %732 = vmatpush.xpose.msra.mxu0 0.0
    %733 = vmatpush.xpose.msra.mxu0 0.0
    %734 = vmatpush.xpose.msra.mxu0 0.0
    %735 = vmatpush.xpose.msra.mxu0 0.0
    %736 = vmatpush.xpose.msra.mxu0 0.0
    %737 = vmatpush.xpose.msra.mxu0 0.0
    %738 = vmatpush.xpose.msra.mxu0 0.0
    %739 = vmatpush.xpose.msra.mxu0 0.0
    %740 = vmatpush.xpose.msra.mxu0 0.0
    %741 = vmatpush.xpose.msra.mxu0 0.0
    %742 = vmatpush.xpose.msra.mxu0 0.0
    %743 = vmatpush.xpose.msra.mxu0 %v727
    %744 = vmatpush.xpose.msra.mxu0 %v724
    %745 = vmatmul.f32.gmra.mxu0 %v718
    %v746 = vpop.f32.mrf.mxu0
    %v747 = vadd.f32 0.0, %v746
    %748 = vmatmul.f32.gmra.mxu0 %v721
    %v749 = vpop.f32.mrf.mxu0
    %v750 = vadd.f32 0.0, %v749
    %751 = vdwg.mxu0
    %v752 = vsel %vm163, %v747, -10000.0
    %v753 = vsel %vm164, %v750, -10000.0
    %v754 = vsel %vm251, %v752, -inf
    %755 = vmax.xlane.f32.xlu0 %v754
    %v756 = vpop.xlane.xlu0 %755
    %v757 = vsel %vm251, %v753, -inf
    %758 = vmax.xlane.f32.xlu0 %v757
    %v759 = vpop.xlane.xlu0 %758
    %v760 = vsub.f32 %v752, %v756
    %v761 = vsub.f32 %v753, %v759
    %v762 = vmul.f32 %v760, 1.442695
    %v763 = vpow.pop %v762
    %v764 = vmul.f32 %v761, 1.442695
    %v765 = vpow.pop %v764
    %v766 = vsel %vm251, %v763, 0.0
    %767 = vadd.xlane.f32.xlu0 %v766
    %v768 = vpop.xlane.xlu0 %767
    %v769 = vsel %vm251, %v765, 0.0
    %770 = vadd.xlane.f32.xlu0 %v769
    %v771 = vpop.xlane.xlu0 %770
    %v772 = vrcp.pop %v768
    %v773 = vmul.f32 %v768, %v772
    %v774 = vsub.f32 1.0, %v773
    %v775 = vmul.f32 %v772, %v774
    %v776 = vadd.f32 %v772, %v775
    %vm777 = vweird.f32 %v768
    %vm778 = vweird.f32 %v772
    %vm779 = vmor %vm777, %vm778
    %v780 = vsel %vm779, %v772, %v776
    %v781 = vand.u32 2147483647, %v768
    %vm782 = vcmp.eq.f32.partialorder %v781, 8.507059e+37
    %v783 = vand.u32 %v768, 2147483648
    %v784 = vor.u32 1.1754944e-38, %v783
    %v785 = vsel %vm782, %v784, %v780
    %v786 = vmul.f32 %v763, %v785
    %v787 = vrcp.pop %v771
    %v788 = vmul.f32 %v771, %v787
    %v789 = vsub.f32 1.0, %v788
    %v790 = vmul.f32 %v787, %v789
    %v791 = vadd.f32 %v787, %v790
    %vm792 = vweird.f32 %v771
    %vm793 = vweird.f32 %v787
    %vm794 = vmor %vm792, %vm793
    %v795 = vsel %vm794, %v787, %v791
    %v796 = vand.u32 2147483647, %v771
    %vm797 = vcmp.eq.f32.partialorder %v796, 8.507059e+37
    %v798 = vand.u32 %v771, 2147483648
    %v799 = vor.u32 1.1754944e-38, %v798
    %v800 = vsel %vm797, %v799, %v795
    %v801 = vmul.f32 %v765, %v800
    %802 = vrot.lane.b32.xlu0 %v146, 32
    %v803 = vpop.permute.xlu0 %802
    %804 = vrot.lane.b32.xlu0 %v149, 32
    %v805 = vpop.permute.xlu0 %804
    %v809 = vsel %vm251, %v786, 0
    %v812 = vsel %vm251, %v801, 0
    %814 = vmatpush.msra.mxu0 0.0
    %815 = vmatpush.msra.mxu0 0.0
    %816 = vmatpush.msra.mxu0 0.0
    %817 = vmatpush.msra.mxu0 0.0
    %818 = vmatpush.msra.mxu0 0.0
    %819 = vmatpush.msra.mxu0 0.0
    %820 = vmatpush.msra.mxu0 0.0
    %821 = vmatpush.msra.mxu0 0.0
    %822 = vmatpush.msra.mxu0 0.0
    %823 = vmatpush.msra.mxu0 0.0
    %824 = vmatpush.msra.mxu0 0.0
    %825 = vmatpush.msra.mxu0 0.0
    %826 = vmatpush.msra.mxu0 0.0
    %827 = vmatpush.msra.mxu0 0.0
    %828 = vmatpush.msra.mxu0 %v805
    %829 = vmatpush.msra.mxu0 %v803
    %830 = vmatmul.f32.gmra.mxu0 %v809
    %v831 = vpop.f32.mrf.mxu0
    %v832 = vadd.f32 0.0, %v831
    %833 = vmatmul.f32.gmra.mxu0 %v812
    %v834 = vpop.f32.mrf.mxu0
    %v835 = vadd.f32 0.0, %v834
    %836 = vdwg.mxu0
    %v837 = vadd.f32 %v667, %v832
    %v838 = vadd.f32 %v668, %v835
    %v839 = vperm.slane %v26, 6
    %v840 = vadd.f32 %v837, %v839
    %v841 = vadd.f32 %v838, %v839
    %v842 = vadd.f32 %v24, %v840
    %v843 = vadd.f32 %v25, %v841
    %v844 = vsel %vm64, %v842, 0.0
    %845 = vadd.xlane.f32.xlu0 %v844
    %v846 = vpop.xlane.xlu0 %845
    %v847 = vsel %vm64, %v843, 0.0
    %848 = vadd.xlane.f32.xlu0 %v847
    %v849 = vpop.xlane.xlu0 %848
    %v850 = vmul.f32 %v846, %v77
    %v851 = vmul.f32 %v849, %v77
    %v852 = vsub.f32 %v842, %v850
    %v853 = vsub.f32 %v843, %v851
    %v854 = vmul.f32 %v852, %v852
    %v855 = vmul.f32 %v853, %v853
    %v856 = vsel %vm64, %v854, 0.0
    %857 = vadd.xlane.f32.xlu0 %v856
    %v858 = vpop.xlane.xlu0 %857
    %v859 = vsel %vm64, %v855, 0.0
    %860 = vadd.xlane.f32.xlu0 %v859
    %v861 = vpop.xlane.xlu0 %860
    %v862 = vmul.f32 %v858, %v77
    %v863 = vmul.f32 %v861, %v77
    %v864 = vadd.f32 %v862, 1e-05
    %v865 = vadd.f32 %v863, 1e-05
    %v866 = vrsqrt.pop %v864
    %v867 = vmul.f32 %v866, %v864
    %v868 = vmul.f32 %v867, %v866
    %v869 = vmul.f32 0.5, %v868
    %v870 = vsub.f32 1.5, %v869
    %v871 = vmul.f32 %v866, %v870
    %vm872 = vweird.f32 %v864
    %vm873 = vweird.f32 %v866
    %vm874 = vmor %vm872, %vm873
    %v875 = vsel %vm874, %v866, %v871
    %v876 = vrsqrt.pop %v865
    %v877 = vmul.f32 %v876, %v865
    %v878 = vmul.f32 %v877, %v876
    %v879 = vmul.f32 0.5, %v878
    %v880 = vsub.f32 1.5, %v879
    %v881 = vmul.f32 %v876, %v880
    %vm882 = vweird.f32 %v865
    %vm883 = vweird.f32 %v876
    %vm884 = vmor %vm882, %vm883
    %v885 = vsel %vm884, %v876, %v881
    %v886 = vmul.f32 %v852, %v875
    %v887 = vmul.f32 %v853, %v885
    %v888 = vperm.slane %v26, 2
    %v889 = vmul.f32 %v886, %v888
    %v890 = vmul.f32 %v887, %v888
    %v891 = vperm.slane %v26, 3
    %v892 = vadd.f32 %v889, %v891
    %v893 = vadd.f32 %v890, %v891
    %v894 = vld [vmem:[%s4] sm:$0xff]
    %v895 = vld [vmem:[%s4 + $0x8] sm:$0xff]
    %v896 = vld [vmem:[%s4 + $0x10] sm:$0xff]
    %v897 = vld [vmem:[%s4 + $0x18] sm:$0xff]
    %v898 = vperm.slane %v26, 4
    %v900 = vsel %vm64, %v892, 0
    %v903 = vsel %vm64, %v893, 0
    %905 = vmatpush.msra.mxu0 0.0
    %906 = vmatpush.msra.mxu0 0.0
    %907 = vmatpush.msra.mxu0 0.0
    %908 = vmatpush.msra.mxu0 0.0
    %909 = vmatpush.msra.mxu0 0.0
    %910 = vmatpush.msra.mxu0 0.0
    %911 = vmatpush.msra.mxu0 0.0
    %912 = vmatpush.msra.mxu0 0.0
    %913 = vmatpush.msra.mxu0 0.0
    %914 = vmatpush.msra.mxu0 0.0
    %915 = vmatpush.msra.mxu0 0.0
    %916 = vmatpush.msra.mxu0 0.0
    %917 = vmatpush.msra.mxu0 %v897
    %918 = vmatpush.msra.mxu0 %v896
    %919 = vmatpush.msra.mxu0 %v895
    %920 = vmatpush.msra.mxu0 %v894
    %921 = vmatmul.f32.gmra.mxu0 %v900
    %v922 = vpop.f32.mrf.mxu0
    %v923 = vadd.f32 %v898, %v922
    %924 = vmatmul.f32.gmra.mxu0 %v903
    %v925 = vpop.f32.mrf.mxu0
    %v926 = vadd.f32 %v898, %v925
    %927 = vdwg.mxu0
    %v928 = vmul.f32 %v923, 0.5
    %v929 = vmul.f32 %v926, 0.5
    %v930 = vmul.f32 %v923, 0.044715
    %v931 = vmul.f32 %v926, 0.044715
    %v932 = vmul.f32 %v930, %v923
    %v933 = vmul.f32 %v931, %v926
    %v934 = vmul.f32 %v932, %v923
    %v935 = vmul.f32 %v933, %v926
    %v936 = vadd.f32 %v923, %v934
    %v937 = vadd.f32 %v926, %v935
    %v938 = vmul.f32 %v936, 0.7978846
    %v939 = vmul.f32 %v937, 0.7978846
    %v940 = vtanh.pop %v938
    %v941 = vtanh.pop %v939
    %v942 = vadd.f32 %v940, 1.0
    %v943 = vadd.f32 %v941, 1.0
    %v944 = vmul.f32 %v928, %v942
    %v945 = vmul.f32 %v929, %v943
    %v946 = vld [vmem:[%s5] sm:$0xff]
    %v947 = vld [vmem:[%s5 + $0x8] sm:$0xff]
    %v948 = vld [vmem:[%s5 + $0x10] sm:$0xff]
    %v949 = vld [vmem:[%s5 + $0x18] sm:$0xff]
    %v950 = vld [vmem:[%s5 + $0x20] sm:$0xff]
    %v951 = vld [vmem:[%s5 + $0x28] sm:$0xff]
    %v952 = vld [vmem:[%s5 + $0x30] sm:$0xff]
    %v953 = vld [vmem:[%s5 + $0x38] sm:$0xff]
    %v954 = vld [vmem:[%s5 + $0x40] sm:$0xff]
    %v955 = vld [vmem:[%s5 + $0x48] sm:$0xff]
    %v956 = vld [vmem:[%s5 + $0x50] sm:$0xff]
    %v957 = vld [vmem:[%s5 + $0x58] sm:$0xff]
    %v958 = vld [vmem:[%s5 + $0x60] sm:$0xff]
    %v959 = vld [vmem:[%s5 + $0x68] sm:$0xff]
    %v960 = vld [vmem:[%s5 + $0x70] sm:$0xff]
    %v961 = vld [vmem:[%s5 + $0x78] sm:$0xff]
    %v962 = vperm.slane %v26, 5
    %963 = vmatpush.msra.mxu0 %v961
    %964 = vmatpush.msra.mxu0 %v960
    %965 = vmatpush.msra.mxu0 %v959
    %966 = vmatpush.msra.mxu0 %v958
    %967 = vmatpush.msra.mxu0 %v957
    %968 = vmatpush.msra.mxu0 %v956
    %969 = vmatpush.msra.mxu0 %v955
    %970 = vmatpush.msra.mxu0 %v954
    %971 = vmatpush.msra.mxu0 %v953
    %972 = vmatpush.msra.mxu0 %v952
    %973 = vmatpush.msra.mxu0 %v951
    %974 = vmatpush.msra.mxu0 %v950
    %975 = vmatpush.msra.mxu0 %v949
    %976 = vmatpush.msra.mxu0 %v948
    %977 = vmatpush.msra.mxu0 %v947
    %978 = vmatpush.msra.mxu0 %v946
    %979 = vmatmul.f32.gmra.mxu0 %v944
    %v980 = vpop.f32.mrf.mxu0
    %v981 = vadd.f32 %v962, %v980
    %982 = vmatmul.f32.gmra.mxu0 %v945
    %v983 = vpop.f32.mrf.mxu0
    %v984 = vadd.f32 %v962, %v983
    %985 = vdwg.mxu0
    %v986 = vadd.f32 %v842, %v981
    %v987 = vadd.f32 %v843, %v984
    %988 = vst.msk [vmem:[#allocation2] sm:$0xff] %vm64, %v986
    %989 = vst.msk [vmem:[#allocation2 + $0x8] sm:$0xff] %vm64, %v987
    // Predicated region
    $region26: #{gpt2_block.1} parent=1 // pred_check
      _
    $region27: #{gpt2_block.1} parent=1 // pred_check_branch
      %991 = sbr.rel (0) target = $region29
    $region28: #{gpt2_block.1} parent=1 // pred_region
      %993 = vsyncadd [#allocation3], 0
      %s994 = sshll.u32 [#allocation2], 4
      %s995 = int_to_ptr.vmem [resolvable:$true] %s994
      %s996 = sshll.u32 %s6, 4
      %s997 = int_to_ptr.hbm [resolvable:$true] %s996
      %1002 = dma.vmem_to_hbm [thread:$0]  %s995, 256, %s997, [#allocation3], 128, 128, 8
    $region29: #{gpt2_block.1} parent=1 // pred_fallthru
      _
    // Predicated region
    $region30: #{gpt2_block.1} parent=1 // pred_check
      _
    $region31: #{gpt2_block.1} parent=1 // pred_check_branch
      %1004 = sbr.rel (0) target = $region33
    $region32: #{gpt2_block.1} parent=1 // pred_region
      %1006 = dma.done [#allocation3], 256
    $region33: #{gpt2_block.1} parent=1 // pred_fallthru
      _
    %1007 = vsyncpa [#allocation3], 1

</llo_original>
